<compile_context>
chip_gen: v7x
topology: tpu7x:2x2x1
jax: 0.10.0
libtpu: 0.0.40
codegen_flags: <defaults>
</compile_context>

<pallas_src>
import jax
import jax.numpy as jnp
from jax.experimental import pallas as pl
from jax.experimental.pallas import tpu as pltpu


def mlp1_kernel(b_ref, w_ref, x_ref, o_ref):
    # b_ref : (1, 2)   f32 bias (tiny VMEM tile, resident)
    # w_ref : (N, 2)   weights, resident across the grid
    # x_ref : (tm, N)  batch tile in natural layout
    # o_ref : (tm, 2)  f32 softmax probabilities
    z = jnp.dot(x_ref[...].astype(w_ref.dtype), w_ref[...],
                preferred_element_type=jnp.float32)          # (tm, 2), f32 acc
    z = z + b_ref[...]                                        # bias on full tile
    z = jnp.where(z >= 0, z, 0.01 * z)                        # LeakyReLU (slope 0.01)

    # 2-class softmax == sigmoid: p1 = 1 / (1 + exp(z0 - z1)), p0 = 1 - p1.
    # No cross-lane max/sum; exp + reciprocal run on the EUP.
    d = jnp.clip(z[:, 0:1] - z[:, 1:2], -60.0, 60.0)          # keep exp finite
    p1 = pl.reciprocal(1.0 + jnp.exp(d), approx=True)
    o_ref[:, 1:2] = p1
    o_ref[:, 0:1] = 1.0 - p1


def _pick_tm(B, N, itemsize, vmem_budget_bytes):
    """Batch-tile size: big enough to amortize grid-step overhead, VMEM-safe."""
    if B <= 128:
        return B
    # Target >= ~1 MiB of input DMA per tile (per-step overhead ~0.35 us).
    tm = max(512, pl.cdiv(1 << 20, N * itemsize))
    tm = ((tm + 127) // 128) * 128
    # Double-buffered x tile must fit the scoped-VMEM budget (v5e-safe).
    max_tm = max(128, (vmem_budget_bytes // (2 * N * itemsize)) // 128 * 128)
    tm = min(tm, max_tm)
    # Keep >= 2 tiles when possible so v7x's second TensorCore has work.
    half = (B // 2) // 128 * 128
    if half >= 128:
        tm = min(tm, half)
    if tm >= B:
        return B
    return tm


def mlp1_forward(x, w, b, *, tm=None, vmem_budget_bytes=12 * 1024 * 1024):
    """x: (B, n_mlp), w: (n_mlp, 2), b: (2,)  ->  (B, 2) float32 softmax probs."""
    B, N = x.shape
    assert w.shape == (N, 2) and b.shape == (2,)

    itemsize = jnp.dtype(x.dtype).itemsize
    w = w.astype(x.dtype)                       # tiny & resident; match x's dtype
    bias = b.reshape(1, 2).astype(jnp.float32)

    if tm is None:
        tm = _pick_tm(B, N, itemsize, vmem_budget_bytes)
    else:
        tm = min(tm, B)
        if tm < B and tm % 128 != 0:
            tm = min(B, ((tm + 127) // 128) * 128)
    grid = (pl.cdiv(B, tm),)                    # partial last block is masked

    # Explicit scoped-VMEM limit: small footprint, generous headroom, safe on
    # every generation (v7x physical VMEM is 64 MiB per TC).
    vmem_bytes = 2 * tm * N * itemsize + 2 * tm * 2 * 4 + N * 2 * itemsize + (8 * 128 * 4)
    vmem_limit = int(min(48 << 20, max(32 << 20, 2 * vmem_bytes)))

    cost = pl.CostEstimate(
        flops=4 * B * N + 8 * B,
        transcendentals=2 * B,
        bytes_accessed=B * N * itemsize + B * 2 * 4 + N * 2 * itemsize + 8,
    )

    out = pl.pallas_call(
        mlp1_kernel,
        out_shape=jax.ShapeDtypeStruct((B, 2), jnp.float32),
        grid_spec=pltpu.PrefetchScalarGridSpec(
            num_scalar_prefetch=0,
            grid=grid,
            in_specs=[
                pl.BlockSpec((1, 2), lambda i: (0, 0)),   # bias (constant block)
                pl.BlockSpec((N, 2), lambda i: (0, 0)),   # weights (constant block)
                pl.BlockSpec((tm, N), lambda i: (i, 0)),  # x batch tile (natural layout)
            ],
            out_specs=pl.BlockSpec((tm, 2), lambda i: (i, 0)),
        ),
        compiler_params=pltpu.CompilerParams(
            dimension_semantics=("parallel",),            # independent batch tiles
            vmem_limit_bytes=vmem_limit,
        ),
        cost_estimate=cost,
    )(bias, w, x)

    return out


def reference(x, w, b):
    z = jnp.dot(x, w, preferred_element_type=jnp.float32) + b[None, :]
    z = jnp.where(z >= 0, z, 0.01 * z)
    return jax.nn.softmax(z, axis=1)


if __name__ == "__main__":
    key = jax.random.PRNGKey(0)
    k_x, k_w, k_b = jax.random.split(key, 3)

    # Small, but large enough to exercise the batch grid (2 tiles of tm=128).
    batch, n_mlp = 256, 32

    bound = 1.0 / (n_mlp ** 0.5)
    x = jax.random.normal(k_x, (batch, n_mlp), dtype=jnp.float32)
    w = jax.random.uniform(k_w, (n_mlp, 2), minval=-bound, maxval=bound,
                           dtype=jnp.float32)
    b = jax.random.uniform(k_b, (2,), minval=-bound, maxval=bound,
                           dtype=jnp.float32)

    out = mlp1_forward(x, w, b)
    out = jax.block_until_ready(out)

    ref = reference(x, w, b)
    assert out.shape == (batch, 2)
    # Rows must be valid probability distributions.
    assert jnp.allclose(jnp.sum(out, axis=1), 1.0, atol=1e-3)
    # Sigmoid-form softmax + approx reciprocal vs exact softmax (same f32 matmul).
    assert jnp.allclose(out, ref, atol=5e-3, rtol=0), float(jnp.max(jnp.abs(out - ref)))
    print("KERNEL_OK")
</pallas_src>

<mosaic_0001>
module attributes {stable_mosaic.version = 11 : i64} {
  func.func @mlp1_kernel(%arg0: i32, %arg1: memref<1x2xf32, #tpu.memory_space<vmem>>, %arg2: memref<32x2xf32, #tpu.memory_space<vmem>>, %arg3: memref<128x32xf32, #tpu.memory_space<vmem>>, %arg4: memref<128x2xf32, #tpu.memory_space<vmem>>) attributes {dimension_semantics = [#tpu.dimension_semantics<parallel>], iteration_bounds = array<i64: 2>, scalar_prefetch = 0 : i64, scratch_operands = 0 : i64, tpu.core_type = #tpu.core_type<tc>, window_params = [{pipeline_mode = #tpu.pipeline_mode<synchronous>, transform_indices = @transform_0, window_bounds = array<i64: 1, 2>}, {pipeline_mode = #tpu.pipeline_mode<synchronous>, transform_indices = @transform_1, window_bounds = array<i64: 32, 2>}, {transform_indices = @transform_2, window_bounds = array<i64: 128, 32>}, {transform_indices = @transform_3, window_bounds = array<i64: 128, 2>}]} {
    %c0 = arith.constant 0 : index
    %c0_0 = arith.constant 0 : index
    %0 = vector.load %arg3[%c0, %c0_0] : memref<128x32xf32, #tpu.memory_space<vmem>>, vector<128x32xf32>
    %c0_1 = arith.constant 0 : index
    %c0_2 = arith.constant 0 : index
    %1 = vector.load %arg2[%c0_1, %c0_2] : memref<32x2xf32, #tpu.memory_space<vmem>>, vector<32x2xf32>
    %cst = arith.constant dense<0.000000e+00> : vector<128x2xf32>
    %2 = tpu.matmul %0, %1, %cst {dimension_numbers = #tpu.dot_dimension_numbers<[1], [0], [0], [1], [0, 0, 1, 1], [], []>} : vector<128x32xf32>, vector<32x2xf32>, vector<128x2xf32> -> vector<128x2xf32>
    %c0_3 = arith.constant 0 : index
    %c0_4 = arith.constant 0 : index
    %3 = vector.load %arg1[%c0_3, %c0_4] : memref<1x2xf32, #tpu.memory_space<vmem>>, vector<1x2xf32>
    %4 = vector.broadcast %3 : vector<1x2xf32> to vector<128x2xf32>
    %5 = arith.addf %2, %4 : vector<128x2xf32>
    %cst_5 = arith.constant 0.000000e+00 : f32
    %6 = vector.broadcast %cst_5 : f32 to vector<128x2xf32>
    %7 = arith.cmpf oge, %5, %6 : vector<128x2xf32>
    %cst_6 = arith.constant 0.00999999977 : f32
    %8 = vector.broadcast %cst_6 : f32 to vector<128x2xf32>
    %9 = arith.mulf %8, %5 : vector<128x2xf32>
    %10 = arith.select %7, %5, %9 : vector<128x2xi1>, vector<128x2xf32>
    %11 = vector.extract_strided_slice %10 {offsets = [0, 0], sizes = [128, 1], strides = [1, 1]} : vector<128x2xf32> to vector<128x1xf32>
    %12 = vector.extract_strided_slice %10 {offsets = [0, 1], sizes = [128, 1], strides = [1, 1]} : vector<128x2xf32> to vector<128x1xf32>
    %13 = arith.subf %11, %12 : vector<128x1xf32>
    %cst_7 = arith.constant -6.000000e+01 : f32
    %cst_8 = arith.constant 6.000000e+01 : f32
    %14 = vector.broadcast %cst_7 : f32 to vector<128x1xf32>
    %15 = arith.maximumf %14, %13 : vector<128x1xf32>
    %16 = vector.broadcast %cst_8 : f32 to vector<128x1xf32>
    %17 = arith.minimumf %16, %15 : vector<128x1xf32>
    %18 = math.exp %17 : vector<128x1xf32>
    %cst_9 = arith.constant 1.000000e+00 : f32
    %19 = vector.broadcast %cst_9 : f32 to vector<128x1xf32>
    %20 = arith.addf %19, %18 : vector<128x1xf32>
    %21 = tpu.reciprocal %20 {approx = true} : vector<128x1xf32> -> vector<128x1xf32>
    %c0_10 = arith.constant 0 : index
    %c1 = arith.constant 1 : index
    %22 = vector.load %arg4[%c0_10, %c1] : memref<128x2xf32, #tpu.memory_space<vmem>>, vector<128x1xf32>
    tpu.vector_store %arg4[%c0_10, %c1], %21 {strides = array<i32>} : memref<128x2xf32, #tpu.memory_space<vmem>>, vector<128x1xf32>,
    %cst_11 = arith.constant 1.000000e+00 : f32
    %23 = vector.broadcast %cst_11 : f32 to vector<128x1xf32>
    %24 = arith.subf %23, %21 : vector<128x1xf32>
    %c0_12 = arith.constant 0 : index
    %c0_13 = arith.constant 0 : index
    %25 = vector.load %arg4[%c0_12, %c0_13] : memref<128x2xf32, #tpu.memory_space<vmem>>, vector<128x1xf32>
    tpu.vector_store %arg4[%c0_12, %c0_13], %24 {strides = array<i32>} : memref<128x2xf32, #tpu.memory_space<vmem>>, vector<128x1xf32>,
    return
  }
  func.func @transform_0(%arg0: i32) -> (i32, i32) {
    %c0_i32 = arith.constant 0 : i32
    %c0_i32_0 = arith.constant 0 : i32
    %c0_i32_1 = arith.constant 0 : i32
    return %c0_i32, %c0_i32_0 : i32, i32
  }
  func.func @transform_1(%arg0: i32) -> (i32, i32) {
    %c0_i32 = arith.constant 0 : i32
    %c0_i32_0 = arith.constant 0 : i32
    %c0_i32_1 = arith.constant 0 : i32
    return %c0_i32, %c0_i32_0 : i32, i32
  }
  func.func @transform_2(%arg0: i32) -> (i32, i32) {
    %c0_i32 = arith.constant 0 : i32
    %c0_i32_0 = arith.constant 0 : i32
    return %arg0, %c0_i32 : i32, i32
  }
  func.func @transform_3(%arg0: i32) -> (i32, i32) {
    %c0_i32 = arith.constant 0 : i32
    %c0_i32_0 = arith.constant 0 : i32
    return %arg0, %c0_i32 : i32, i32
  }
}

</mosaic_0001>

<llo_original>
// kernel: tpu_custom_call.1
$region0: #{tpu_custom_call.1}
  #allocation0 [shape = 'u32[]', space=smem, size = 0x4, offset = 0x4, fixed_abs, tag = 'smem constant byte address 0x4 - core index']
  #allocation1 [shape = 'u32[144,128]{1,0:T(1,128)}', space=vmem, size = 0x12000, scoped, tag = 'internal scratch']
  %s0 = inlined_call_operand.vmem [shape: f32[1,2], index: 0, kind: input, shape index: {}]
  %s1 = inlined_call_operand.vmem [shape: f32[32,2], index: 1, kind: input, shape index: {}]
  %s2 = inlined_call_operand.vmem [shape: f32[256,32], index: 2, kind: input, shape index: {}]
  %s3 = inlined_call_operand.vmem [shape: f32[256,2], index: 3, kind: output, shape index: {}]
  %s4 = sld [smem:[#allocation0]]
  $region45: #{tpu_custom_call.1} parent=0
    _
  %s6 = ssub.s32 1, %s4
  %s7 = scalar_select 0, %s6, %s4
  loop: start=0, step=1, limit=4
  $region2: #{tpu_custom_call.1} parent=0 // loop_pre_header
    _
  $region3: #{tpu_custom_call.1} parent=0 // loop_header
    %s9 = sphi 0, %s13
    %p10 = scmp.ge.s32.totalorder %s9, 4
    %s17 = sphi 0, %s17
    %s19 = sphi 0, %s17
    %s20 = sphi 0, %s19
    %s34 = sphi 0, %s20
    %s38 = sphi 0, %s38
    %s40 = sphi 0, %s38
    %s41 = sphi 0, %s40
    %s55 = sphi 0, %s41
    %s61 = sphi 0, %s63
    %s64 = sphi 0, %s61
    %s65 = sphi 0, %s64
    %s81 = sphi 0, %s65
    %s87 = sphi 0, %s89
    %s90 = sphi 0, %s87
    %s91 = sphi 0, %s90
    %s107 = sphi 0, %s91
  $region4: #{tpu_custom_call.1} parent=0 // loop_header_branch
    %12 = sbr.rel (%p10) target = $region8
  $region5: #{tpu_custom_call.1} parent=0 // loop_body
    %s14 = ssub.s32 %s9, 1
    %s15 = ssub.s32 %s9, 2
    %s16 = sadd.s32 %s9, 1
    %s18 = sadd.s32 %s17, 1
    %p21 = scmp.eq.s32.totalorder %s9, 1
    %p22 = scmp.ne.s32.totalorder %s17, %s19
    %p23 = scmp.eq.s32.totalorder %s9, 0
    %p24 = por %p22, %p23
    %p25 = scmp.ne.s32.totalorder %s17, %s19
    %p26 = scmp.eq.s32.totalorder %s14, 1
    %p27 = por %p25, %p26
    %p28 = scmp.ne.s32.totalorder %s19, %s20
    %p29 = scmp.eq.s32.totalorder %s14, 0
    %p30 = por %p28, %p29
    %p31 = scmp.ne.s32.totalorder %s19, %s20
    %p32 = scmp.eq.s32.totalorder %s15, 1
    %p33 = por %p31, %p32
    %p35 = scmp.ne.s32.totalorder %s20, %s34
    %p36 = scmp.eq.s32.totalorder %s15, 0
    %p37 = por %p35, %p36
    %s39 = sadd.s32 %s38, 1
    %p42 = scmp.eq.s32.totalorder %s9, 1
    %p43 = scmp.ne.s32.totalorder %s38, %s40
    %p44 = scmp.eq.s32.totalorder %s9, 0
    %p45 = por %p43, %p44
    %p46 = scmp.ne.s32.totalorder %s38, %s40
    %p47 = scmp.eq.s32.totalorder %s14, 1
    %p48 = por %p46, %p47
    %p49 = scmp.ne.s32.totalorder %s40, %s41
    %p50 = scmp.eq.s32.totalorder %s14, 0
    %p51 = por %p49, %p50
    %p52 = scmp.ne.s32.totalorder %s40, %s41
    %p53 = scmp.eq.s32.totalorder %s15, 1
    %p54 = por %p52, %p53
    %p56 = scmp.ne.s32.totalorder %s41, %s55
    %p57 = scmp.eq.s32.totalorder %s15, 0
    %p58 = por %p56, %p57
    %s59 = ssub.s32 %s9, %s16
    %p60 = scmp.eq.s32.totalorder %s59, 0
    %s62 = sadd.s32 %s61, 1
    %s63 = scalar_select %p60, %s61, %s62
    %p66 = pneg %p60
    %p67 = scmp.eq.s32.totalorder %s9, 1
    %p68 = por %p66, %p67
    %p69 = scmp.ne.s32.totalorder %s61, %s64
    %p70 = scmp.eq.s32.totalorder %s9, 0
    %p71 = por %p69, %p70
    %p72 = scmp.ne.s32.totalorder %s61, %s64
    %p73 = scmp.eq.s32.totalorder %s14, 1
    %p74 = por %p72, %p73
    %p75 = scmp.ne.s32.totalorder %s64, %s65
    %p76 = scmp.eq.s32.totalorder %s14, 0
    %p77 = por %p75, %p76
    %p78 = scmp.ne.s32.totalorder %s64, %s65
    %p79 = scmp.eq.s32.totalorder %s15, 1
    %p80 = por %p78, %p79
    %p82 = scmp.ne.s32.totalorder %s65, %s81
    %p83 = scmp.eq.s32.totalorder %s15, 0
    %p84 = por %p82, %p83
    %s85 = ssub.s32 %s9, %s16
    %p86 = scmp.eq.s32.totalorder %s85, 0
    %s88 = sadd.s32 %s87, 1
    %s89 = scalar_select %p86, %s87, %s88
    %p92 = pneg %p86
    %p93 = scmp.eq.s32.totalorder %s9, 1
    %p94 = por %p92, %p93
    %p95 = scmp.ne.s32.totalorder %s87, %s90
    %p96 = scmp.eq.s32.totalorder %s9, 0
    %p97 = por %p95, %p96
    %p98 = scmp.ne.s32.totalorder %s87, %s90
    %p99 = scmp.eq.s32.totalorder %s14, 1
    %p100 = por %p98, %p99
    %p101 = scmp.ne.s32.totalorder %s90, %s91
    %p102 = scmp.eq.s32.totalorder %s14, 0
    %p103 = por %p101, %p102
    %p104 = scmp.ne.s32.totalorder %s90, %s91
    %p105 = scmp.eq.s32.totalorder %s15, 1
    %p106 = por %p104, %p105
    %p108 = scmp.ne.s32.totalorder %s91, %s107
    %p109 = scmp.eq.s32.totalorder %s15, 0
    %p110 = por %p108, %p109
    %p111 = scmp.le.s32.totalorder 1, %s9
    %p112 = scmp.lt.s32.totalorder %s9, 3
    %p113 = pnand %p111, %p112
    %p114 = pneg %p113
    // Predicated region
    $region9: #{tpu_custom_call.1} parent=5 // pred_check
      _
    $region10: #{tpu_custom_call.1} parent=5 // pred_check_branch
      %116 = sbr.rel (%p113) target = $region12
    $region11: #{tpu_custom_call.1} parent=5 // pred_region
      %s117 = ssub.s32 %s9, 1
      // Predicated region
      $region13: #{tpu_custom_call.1} parent=11 // pred_check
        %p118 = pneg %p30
      $region14: #{tpu_custom_call.1} parent=11 // pred_check_branch
        %120 = sbr.rel (%p118) target = $region16
      $region15: #{tpu_custom_call.1} parent=11 // pred_region
        _
      $region16: #{tpu_custom_call.1} parent=11 // pred_fallthru
        _
      // Predicated region
      $region17: #{tpu_custom_call.1} parent=11 // pred_check
        %p121 = pneg %p51
      $region18: #{tpu_custom_call.1} parent=11 // pred_check_branch
        %123 = sbr.rel (%p121) target = $region20
      $region19: #{tpu_custom_call.1} parent=11 // pred_region
        _
      $region20: #{tpu_custom_call.1} parent=11 // pred_fallthru
        _
    $region12: #{tpu_custom_call.1} parent=5 // pred_fallthru
      _
    %p124 = scmp.lt.s32.totalorder %s9, 2
    // Predicated region
    $region21: #{tpu_custom_call.1} parent=5 // pred_check
      %p125 = pneg %p124
    $region22: #{tpu_custom_call.1} parent=5 // pred_check_branch
      %127 = sbr.rel (%p125) target = $region24
    $region23: #{tpu_custom_call.1} parent=5 // pred_region
      // Predicated region
      $region25: #{tpu_custom_call.1} parent=23 // pred_check
        %p128 = pneg %p71
      $region26: #{tpu_custom_call.1} parent=23 // pred_check_branch
        %130 = sbr.rel (%p128) target = $region28
      $region27: #{tpu_custom_call.1} parent=23 // pred_region
        %s131 = smul.u32 16, %s9
        %p132 = scmp.lt.s32.totalorder %s131, 31
        %s133 = scalar_select %p132, %s131, 31
        %s134 = smul.addr %s133, 8
        %s135 = scalar_lea.vmem %s2, %s134
        %s136 = smul.u32 16, %s9
      $region28: #{tpu_custom_call.1} parent=23 // pred_fallthru
        _
    $region24: #{tpu_custom_call.1} parent=5 // pred_fallthru
      _
    %p137 = scmp.le.s32.totalorder 1, %s9
    %p138 = scmp.lt.s32.totalorder %s9, 3
    %p139 = pnand %p137, %p138
    %p140 = pneg %p139
    // Predicated region
    $region29: #{tpu_custom_call.1} parent=5 // pred_check
      _
    $region30: #{tpu_custom_call.1} parent=5 // pred_check_branch
      %142 = sbr.rel (%p139) target = $region32
    $region31: #{tpu_custom_call.1} parent=5 // pred_region
      %s143 = ssub.s32 %s9, 1
      %p144 = pneg %p30
      %p145 = pneg %p27
      %p146 = pneg %p51
      %p147 = pneg %p48
      %s148 = smul.u32 16, %s14
      %p149 = scmp.lt.s32.totalorder %s148, 31
      %s150 = scalar_select %p149, %s148, 31
      %s151 = smul.addr %s150, 8
      %s152 = scalar_lea.vmem %s2, %s151
      %p153 = pneg %p77
      %p154 = pneg %p74
      %p155 = pneg %p103
      %p156 = pneg %p100
      %s157 = smul.u32 16, %s14
      %p158 = scmp.lt.s32.totalorder %s157, 31
      %s159 = scalar_select %p158, %s157, 31
      %s160 = smul.addr %s159, 8
      %s161 = scalar_lea.vmem %s3, %s160
      %s162 = smul.u32 16, %s14
      %p163 = scmp.lt.s32.totalorder %s162, 31
      %s164 = scalar_select %p163, %s162, 31
      %s165 = smul.addr %s164, 8
      %s166 = scalar_lea.vmem %s2, %s165
      %s167 = smul.u32 16, %s14
      %s168 = smul.u32 16, %s14
      %p169 = scmp.lt.s32.totalorder %s168, 31
      %s170 = scalar_select %p169, %s168, 31
      %s171 = smul.addr %s170, 8
      %s172 = scalar_lea.vmem %s3, %s171
      %s173 = smul.u32 16, %s14
      %v174 = vld [vmem:[%s166] sm:$0xff]
      %v175 = vld [vmem:[%s166 + $0x8] sm:$0xff]
      %v176 = vld [vmem:[%s166 + $0x10] sm:$0xff]
      %v177 = vld [vmem:[%s166 + $0x18] sm:$0xff]
      %v178 = vld [vmem:[%s166 + $0x20] sm:$0xff]
      %v179 = vld [vmem:[%s166 + $0x28] sm:$0xff]
      %v180 = vld [vmem:[%s166 + $0x30] sm:$0xff]
      %v181 = vld [vmem:[%s166 + $0x38] sm:$0xff]
      %v182 = vld [vmem:[%s166 + $0x40] sm:$0xff]
      %v183 = vld [vmem:[%s166 + $0x48] sm:$0xff]
      %v184 = vld [vmem:[%s166 + $0x50] sm:$0xff]
      %v185 = vld [vmem:[%s166 + $0x58] sm:$0xff]
      %v186 = vld [vmem:[%s166 + $0x60] sm:$0xff]
      %v187 = vld [vmem:[%s166 + $0x68] sm:$0xff]
      %v188 = vld [vmem:[%s166 + $0x70] sm:$0xff]
      %v189 = vld [vmem:[%s166 + $0x78] sm:$0xff]
      %v190 = vld [vmem:[%s1] sm:$0xff]
      %v191 = vld [vmem:[%s1 + $0x8] sm:$0xff]
      %v192 = vld [vmem:[%s1 + $0x10] sm:$0xff]
      %v193 = vld [vmem:[%s1 + $0x18] sm:$0xff]
      %v194 = vld [vmem:[%s0] sm:$0x1]
      %v196 = vlaneseq
      %v197 = vshrl.u32 %v196, 7
      %v198 = vsub.s32 0, %v197
      %v199 = vrot.slane %v194, %v198
      %vm201 = vcmask 261120
      %v203 = vsel %vm201, %v174, 0
      %v206 = vsel %vm201, %v175, 0
      %v209 = vsel %vm201, %v176, 0
      %v212 = vsel %vm201, %v177, 0
      %v215 = vsel %vm201, %v178, 0
      %v218 = vsel %vm201, %v179, 0
      %v221 = vsel %vm201, %v180, 0
      %v224 = vsel %vm201, %v181, 0
      %v227 = vsel %vm201, %v182, 0
      %v230 = vsel %vm201, %v183, 0
      %v233 = vsel %vm201, %v184, 0
      %v236 = vsel %vm201, %v185, 0
      %v239 = vsel %vm201, %v186, 0
      %v242 = vsel %vm201, %v187, 0
      %v245 = vsel %vm201, %v188, 0
      %v248 = vsel %vm201, %v189, 0
      %250 = vmatprep.subr.mxu0 0.0
      %251 = vmatpush1.msra.mxu0 %v190
      %252 = vmatprep.subr.mxu0 0.0
      %253 = vmatpush1.msra.mxu0 %v191
      %254 = vmatprep.subr.mxu0 0.0
      %255 = vmatpush1.msra.mxu0 %v192
      %256 = vmatprep.subr.mxu0 0.0
      %257 = vmatpush1.msra.mxu0 %v193
      %258 = vmatprep.subr.mxu0 0.0
      %259 = vmatpush1.msra.mxu0 0.0
      %260 = vmatprep.subr.mxu0 0.0
      %261 = vmatpush1.msra.mxu0 0.0
      %262 = vmatprep.subr.mxu0 0.0
      %263 = vmatpush1.msra.mxu0 0.0
      %264 = vmatprep.subr.mxu0 0.0
      %265 = vmatpush1.msra.mxu0 0.0
      %266 = vmatprep.subr.mxu0 0.0
      %267 = vmatpush1.msra.mxu0 0.0
      %268 = vmatprep.subr.mxu0 0.0
      %269 = vmatpush1.msra.mxu0 0.0
      %270 = vmatprep.subr.mxu0 0.0
      %271 = vmatpush1.msra.mxu0 0.0
      %272 = vmatprep.subr.mxu0 0.0
      %273 = vmatpush1.msra.mxu0 0.0
      %274 = vmatprep.subr.mxu0 0.0
      %275 = vmatpush1.msra.mxu0 0.0
      %276 = vmatprep.subr.mxu0 0.0
      %277 = vmatpush1.msra.mxu0 0.0
      %278 = vmatprep.subr.mxu0 0.0
      %279 = vmatpush1.msra.mxu0 0.0
      %280 = vmatprep.subr.mxu0 0.0
      %281 = vmatpush1.msra.mxu0 0.0
      %282 = vmatprep.subr.mxu0 0.0
      %283 = vmatpush1.msra.mxu0 0.0
      %284 = vmatprep.subr.mxu0 0.0
      %285 = vmatpush1.msra.mxu0 0.0
      %286 = vmatprep.subr.mxu0 0.0
      %287 = vmatpush1.msra.mxu0 0.0
      %288 = vmatprep.subr.mxu0 0.0
      %289 = vmatpush1.msra.mxu0 0.0
      %290 = vmatprep.subr.mxu0 0.0
      %291 = vmatpush1.msra.mxu0 0.0
      %292 = vmatprep.subr.mxu0 0.0
      %293 = vmatpush1.msra.mxu0 0.0
      %294 = vmatprep.subr.mxu0 0.0
      %295 = vmatpush1.msra.mxu0 0.0
      %296 = vmatprep.subr.mxu0 0.0
      %297 = vmatpush1.msra.mxu0 0.0
      %298 = vmatprep.subr.mxu0 0.0
      %299 = vmatpush1.msra.mxu0 0.0
      %300 = vmatprep.subr.mxu0 0.0
      %301 = vmatpush1.msra.mxu0 0.0
      %302 = vmatprep.subr.mxu0 0.0
      %303 = vmatpush1.msra.mxu0 0.0
      %304 = vmatprep.subr.mxu0 0.0
      %305 = vmatpush1.msra.mxu0 0.0
      %306 = vmatprep.subr.mxu0 0.0
      %307 = vmatpush1.msra.mxu0 0.0
      %308 = vmatprep.subr.mxu0 0.0
      %309 = vmatpush1.msra.mxu0 0.0
      %310 = vmatprep.subr.mxu0 0.0
      %311 = vmatpush1.msra.mxu0 0.0
      %312 = vmatprep.subr.mxu0 0.0
      %313 = vmatpush1.msra.mxu0 0.0
      %314 = vmatprep.mubr.f32.mxu0 0.0
      %315 = vmatmul.mubr.f32.gmra.mrb[0].mxu0 %v203
      %v316 = vpop.f32.mrb[0].mxu0
      %v317 = vadd.f32 %v199, %v316
      %v318 = vpop.f32.mrb[0].mxu0
      %319 = vmatprep.mubr.f32.mxu0 0.0
      %320 = vmatmul.mubr.f32.gmra.mrb[0].mxu0 %v206
      %v321 = vpop.f32.mrb[0].mxu0
      %v322 = vadd.f32 %v199, %v321
      %v323 = vpop.f32.mrb[0].mxu0
      %324 = vmatprep.mubr.f32.mxu0 0.0
      %325 = vmatmul.mubr.f32.gmra.mrb[0].mxu0 %v209
      %v326 = vpop.f32.mrb[0].mxu0
      %v327 = vadd.f32 %v199, %v326
      %v328 = vpop.f32.mrb[0].mxu0
      %329 = vmatprep.mubr.f32.mxu0 0.0
      %330 = vmatmul.mubr.f32.gmra.mrb[0].mxu0 %v212
      %v331 = vpop.f32.mrb[0].mxu0
      %v332 = vadd.f32 %v199, %v331
      %v333 = vpop.f32.mrb[0].mxu0
      %334 = vmatprep.mubr.f32.mxu0 0.0
      %335 = vmatmul.mubr.f32.gmra.mrb[0].mxu0 %v215
      %v336 = vpop.f32.mrb[0].mxu0
      %v337 = vadd.f32 %v199, %v336
      %v338 = vpop.f32.mrb[0].mxu0
      %339 = vmatprep.mubr.f32.mxu0 0.0
      %340 = vmatmul.mubr.f32.gmra.mrb[0].mxu0 %v218
      %v341 = vpop.f32.mrb[0].mxu0
      %v342 = vadd.f32 %v199, %v341
      %v343 = vpop.f32.mrb[0].mxu0
      %344 = vmatprep.mubr.f32.mxu0 0.0
      %345 = vmatmul.mubr.f32.gmra.mrb[0].mxu0 %v221
      %v346 = vpop.f32.mrb[0].mxu0
      %v347 = vadd.f32 %v199, %v346
      %v348 = vpop.f32.mrb[0].mxu0
      %349 = vmatprep.mubr.f32.mxu0 0.0
      %350 = vmatmul.mubr.f32.gmra.mrb[0].mxu0 %v224
      %v351 = vpop.f32.mrb[0].mxu0
      %v352 = vadd.f32 %v199, %v351
      %v353 = vpop.f32.mrb[0].mxu0
      %354 = vmatprep.mubr.f32.mxu0 0.0
      %355 = vmatmul.mubr.f32.gmra.mrb[0].mxu0 %v227
      %v356 = vpop.f32.mrb[0].mxu0
      %v357 = vadd.f32 %v199, %v356
      %v358 = vpop.f32.mrb[0].mxu0
      %359 = vmatprep.mubr.f32.mxu0 0.0
      %360 = vmatmul.mubr.f32.gmra.mrb[0].mxu0 %v230
      %v361 = vpop.f32.mrb[0].mxu0
      %v362 = vadd.f32 %v199, %v361
      %v363 = vpop.f32.mrb[0].mxu0
      %364 = vmatprep.mubr.f32.mxu0 0.0
      %365 = vmatmul.mubr.f32.gmra.mrb[0].mxu0 %v233
      %v366 = vpop.f32.mrb[0].mxu0
      %v367 = vadd.f32 %v199, %v366
      %v368 = vpop.f32.mrb[0].mxu0
      %369 = vmatprep.mubr.f32.mxu0 0.0
      %370 = vmatmul.mubr.f32.gmra.mrb[0].mxu0 %v236
      %v371 = vpop.f32.mrb[0].mxu0
      %v372 = vadd.f32 %v199, %v371
      %v373 = vpop.f32.mrb[0].mxu0
      %374 = vmatprep.mubr.f32.mxu0 0.0
      %375 = vmatmul.mubr.f32.gmra.mrb[0].mxu0 %v239
      %v376 = vpop.f32.mrb[0].mxu0
      %v377 = vadd.f32 %v199, %v376
      %v378 = vpop.f32.mrb[0].mxu0
      %379 = vmatprep.mubr.f32.mxu0 0.0
      %380 = vmatmul.mubr.f32.gmra.mrb[0].mxu0 %v242
      %v381 = vpop.f32.mrb[0].mxu0
      %v382 = vadd.f32 %v199, %v381
      %v383 = vpop.f32.mrb[0].mxu0
      %384 = vmatprep.mubr.f32.mxu0 0.0
      %385 = vmatmul.mubr.f32.gmra.mrb[0].mxu0 %v245
      %v386 = vpop.f32.mrb[0].mxu0
      %v387 = vadd.f32 %v199, %v386
      %v388 = vpop.f32.mrb[0].mxu0
      %389 = vmatprep.mubr.f32.mxu0 0.0
      %390 = vmatmul.mubr.f32.gmra.mrb[0].mxu0 %v248
      %v391 = vpop.f32.mrb[0].mxu0
      %v392 = vadd.f32 %v199, %v391
      %v393 = vpop.f32.mrb[0].mxu0
      %394 = vdwg.mxu0
      %vm395 = vcmp.ge.f32.partialorder %v317, 0.0
      %vm396 = vcmp.ge.f32.partialorder %v322, 0.0
      %vm397 = vcmp.ge.f32.partialorder %v327, 0.0
      %vm398 = vcmp.ge.f32.partialorder %v332, 0.0
      %vm399 = vcmp.ge.f32.partialorder %v337, 0.0
      %vm400 = vcmp.ge.f32.partialorder %v342, 0.0
      %vm401 = vcmp.ge.f32.partialorder %v347, 0.0
      %vm402 = vcmp.ge.f32.partialorder %v352, 0.0
      %vm403 = vcmp.ge.f32.partialorder %v357, 0.0
      %vm404 = vcmp.ge.f32.partialorder %v362, 0.0
      %vm405 = vcmp.ge.f32.partialorder %v367, 0.0
      %vm406 = vcmp.ge.f32.partialorder %v372, 0.0
      %vm407 = vcmp.ge.f32.partialorder %v377, 0.0
      %vm408 = vcmp.ge.f32.partialorder %v382, 0.0
      %vm409 = vcmp.ge.f32.partialorder %v387, 0.0
      %vm410 = vcmp.ge.f32.partialorder %v392, 0.0
      %v411 = vmul.f32 %v317, 0.01
      %v412 = vmul.f32 %v322, 0.01
      %v413 = vmul.f32 %v327, 0.01
      %v414 = vmul.f32 %v332, 0.01
      %v415 = vmul.f32 %v337, 0.01
      %v416 = vmul.f32 %v342, 0.01
      %v417 = vmul.f32 %v347, 0.01
      %v418 = vmul.f32 %v352, 0.01
      %v419 = vmul.f32 %v357, 0.01
      %v420 = vmul.f32 %v362, 0.01
      %v421 = vmul.f32 %v367, 0.01
      %v422 = vmul.f32 %v372, 0.01
      %v423 = vmul.f32 %v377, 0.01
      %v424 = vmul.f32 %v382, 0.01
      %v425 = vmul.f32 %v387, 0.01
      %v426 = vmul.f32 %v392, 0.01
      %v427 = vsel %vm395, %v317, %v411
      %v428 = vsel %vm396, %v322, %v412
      %v429 = vsel %vm397, %v327, %v413
      %v430 = vsel %vm398, %v332, %v414
      %v431 = vsel %vm399, %v337, %v415
      %v432 = vsel %vm400, %v342, %v416
      %v433 = vsel %vm401, %v347, %v417
      %v434 = vsel %vm402, %v352, %v418
      %v435 = vsel %vm403, %v357, %v419
      %v436 = vsel %vm404, %v362, %v420
      %v437 = vsel %vm405, %v367, %v421
      %v438 = vsel %vm406, %v372, %v422
      %v439 = vsel %vm407, %v377, %v423
      %v440 = vsel %vm408, %v382, %v424
      %v441 = vsel %vm409, %v387, %v425
      %v442 = vsel %vm410, %v392, %v426
      %459 = vrot.lane.b32.xlu0 %v427, 127
      %v460 = vpop.permute.xlu0 %459
      %461 = vrot.lane.b32.xlu0 %v428, 127
      %v462 = vpop.permute.xlu0 %461
      %463 = vrot.lane.b32.xlu0 %v429, 127
      %v464 = vpop.permute.xlu0 %463
      %465 = vrot.lane.b32.xlu0 %v430, 127
      %v466 = vpop.permute.xlu0 %465
      %467 = vrot.lane.b32.xlu0 %v431, 127
      %v468 = vpop.permute.xlu0 %467
      %469 = vrot.lane.b32.xlu0 %v432, 127
      %v470 = vpop.permute.xlu0 %469
      %471 = vrot.lane.b32.xlu0 %v433, 127
      %v472 = vpop.permute.xlu0 %471
      %473 = vrot.lane.b32.xlu0 %v434, 127
      %v474 = vpop.permute.xlu0 %473
      %475 = vrot.lane.b32.xlu0 %v435, 127
      %v476 = vpop.permute.xlu0 %475
      %477 = vrot.lane.b32.xlu0 %v436, 127
      %v478 = vpop.permute.xlu0 %477
      %479 = vrot.lane.b32.xlu0 %v437, 127
      %v480 = vpop.permute.xlu0 %479
      %481 = vrot.lane.b32.xlu0 %v438, 127
      %v482 = vpop.permute.xlu0 %481
      %483 = vrot.lane.b32.xlu0 %v439, 127
      %v484 = vpop.permute.xlu0 %483
      %485 = vrot.lane.b32.xlu0 %v440, 127
      %v486 = vpop.permute.xlu0 %485
      %487 = vrot.lane.b32.xlu0 %v441, 127
      %v488 = vpop.permute.xlu0 %487
      %489 = vrot.lane.b32.xlu0 %v442, 127
      %v490 = vpop.permute.xlu0 %489
      %v507 = vsub.f32 %v427, %v460
      %v508 = vsub.f32 %v428, %v462
      %v509 = vsub.f32 %v429, %v464
      %v510 = vsub.f32 %v430, %v466
      %v511 = vsub.f32 %v431, %v468
      %v512 = vsub.f32 %v432, %v470
      %v513 = vsub.f32 %v433, %v472
      %v514 = vsub.f32 %v434, %v474
      %v515 = vsub.f32 %v435, %v476
      %v516 = vsub.f32 %v436, %v478
      %v517 = vsub.f32 %v437, %v480
      %v518 = vsub.f32 %v438, %v482
      %v519 = vsub.f32 %v439, %v484
      %v520 = vsub.f32 %v440, %v486
      %v521 = vsub.f32 %v441, %v488
      %v522 = vsub.f32 %v442, %v490
      %v523 = vmax.f32 %v507, -60.0
      %v524 = vmax.f32 %v508, -60.0
      %v525 = vmax.f32 %v509, -60.0
      %v526 = vmax.f32 %v510, -60.0
      %v527 = vmax.f32 %v511, -60.0
      %v528 = vmax.f32 %v512, -60.0
      %v529 = vmax.f32 %v513, -60.0
      %v530 = vmax.f32 %v514, -60.0
      %v531 = vmax.f32 %v515, -60.0
      %v532 = vmax.f32 %v516, -60.0
      %v533 = vmax.f32 %v517, -60.0
      %v534 = vmax.f32 %v518, -60.0
      %v535 = vmax.f32 %v519, -60.0
      %v536 = vmax.f32 %v520, -60.0
      %v537 = vmax.f32 %v521, -60.0
      %v538 = vmax.f32 %v522, -60.0
      %v539 = vmin.f32 %v523, 60.0
      %v540 = vmin.f32 %v524, 60.0
      %v541 = vmin.f32 %v525, 60.0
      %v542 = vmin.f32 %v526, 60.0
      %v543 = vmin.f32 %v527, 60.0
      %v544 = vmin.f32 %v528, 60.0
      %v545 = vmin.f32 %v529, 60.0
      %v546 = vmin.f32 %v530, 60.0
      %v547 = vmin.f32 %v531, 60.0
      %v548 = vmin.f32 %v532, 60.0
      %v549 = vmin.f32 %v533, 60.0
      %v550 = vmin.f32 %v534, 60.0
      %v551 = vmin.f32 %v535, 60.0
      %v552 = vmin.f32 %v536, 60.0
      %v553 = vmin.f32 %v537, 60.0
      %v554 = vmin.f32 %v538, 60.0
      %v555 = vmul.f32 %v539, 1.442695
      %v556 = vpow.pop %v555
      %v557 = vmul.f32 %v540, 1.442695
      %v558 = vpow.pop %v557
      %v559 = vmul.f32 %v541, 1.442695
      %v560 = vpow.pop %v559
      %v561 = vmul.f32 %v542, 1.442695
      %v562 = vpow.pop %v561
      %v563 = vmul.f32 %v543, 1.442695
      %v564 = vpow.pop %v563
      %v565 = vmul.f32 %v544, 1.442695
      %v566 = vpow.pop %v565
      %v567 = vmul.f32 %v545, 1.442695
      %v568 = vpow.pop %v567
      %v569 = vmul.f32 %v546, 1.442695
      %v570 = vpow.pop %v569
      %v571 = vmul.f32 %v547, 1.442695
      %v572 = vpow.pop %v571
      %v573 = vmul.f32 %v548, 1.442695
      %v574 = vpow.pop %v573
      %v575 = vmul.f32 %v549, 1.442695
      %v576 = vpow.pop %v575
      %v577 = vmul.f32 %v550, 1.442695
      %v578 = vpow.pop %v577
      %v579 = vmul.f32 %v551, 1.442695
      %v580 = vpow.pop %v579
      %v581 = vmul.f32 %v552, 1.442695
      %v582 = vpow.pop %v581
      %v583 = vmul.f32 %v553, 1.442695
      %v584 = vpow.pop %v583
      %v585 = vmul.f32 %v554, 1.442695
      %v586 = vpow.pop %v585
      %v587 = vadd.f32 %v556, 1.0
      %v588 = vadd.f32 %v558, 1.0
      %v589 = vadd.f32 %v560, 1.0
      %v590 = vadd.f32 %v562, 1.0
      %v591 = vadd.f32 %v564, 1.0
      %v592 = vadd.f32 %v566, 1.0
      %v593 = vadd.f32 %v568, 1.0
      %v594 = vadd.f32 %v570, 1.0
      %v595 = vadd.f32 %v572, 1.0
      %v596 = vadd.f32 %v574, 1.0
      %v597 = vadd.f32 %v576, 1.0
      %v598 = vadd.f32 %v578, 1.0
      %v599 = vadd.f32 %v580, 1.0
      %v600 = vadd.f32 %v582, 1.0
      %v601 = vadd.f32 %v584, 1.0
      %v602 = vadd.f32 %v586, 1.0
      %v603 = vrcp.pop %v587
      %v604 = vrcp.pop %v588
      %v605 = vrcp.pop %v589
      %v606 = vrcp.pop %v590
      %v607 = vrcp.pop %v591
      %v608 = vrcp.pop %v592
      %v609 = vrcp.pop %v593
      %v610 = vrcp.pop %v594
      %v611 = vrcp.pop %v595
      %v612 = vrcp.pop %v596
      %v613 = vrcp.pop %v597
      %v614 = vrcp.pop %v598
      %v615 = vrcp.pop %v599
      %v616 = vrcp.pop %v600
      %v617 = vrcp.pop %v601
      %v618 = vrcp.pop %v602
      %635 = vrot.lane.b32.xlu0 %v603, 1
      %v636 = vpop.permute.xlu0 %635
      %637 = vrot.lane.b32.xlu0 %v604, 1
      %v638 = vpop.permute.xlu0 %637
      %639 = vrot.lane.b32.xlu0 %v605, 1
      %v640 = vpop.permute.xlu0 %639
      %641 = vrot.lane.b32.xlu0 %v606, 1
      %v642 = vpop.permute.xlu0 %641
      %643 = vrot.lane.b32.xlu0 %v607, 1
      %v644 = vpop.permute.xlu0 %643
      %645 = vrot.lane.b32.xlu0 %v608, 1
      %v646 = vpop.permute.xlu0 %645
      %647 = vrot.lane.b32.xlu0 %v609, 1
      %v648 = vpop.permute.xlu0 %647
      %649 = vrot.lane.b32.xlu0 %v610, 1
      %v650 = vpop.permute.xlu0 %649
      %651 = vrot.lane.b32.xlu0 %v611, 1
      %v652 = vpop.permute.xlu0 %651
      %653 = vrot.lane.b32.xlu0 %v612, 1
      %v654 = vpop.permute.xlu0 %653
      %655 = vrot.lane.b32.xlu0 %v613, 1
      %v656 = vpop.permute.xlu0 %655
      %657 = vrot.lane.b32.xlu0 %v614, 1
      %v658 = vpop.permute.xlu0 %657
      %659 = vrot.lane.b32.xlu0 %v615, 1
      %v660 = vpop.permute.xlu0 %659
      %661 = vrot.lane.b32.xlu0 %v616, 1
      %v662 = vpop.permute.xlu0 %661
      %663 = vrot.lane.b32.xlu0 %v617, 1
      %v664 = vpop.permute.xlu0 %663
      %665 = vrot.lane.b32.xlu0 %v618, 1
      %v666 = vpop.permute.xlu0 %665
      %vm683 = vcmask 15368
      %684 = vst.msk [vmem:[%s172] sm:$0xff] %vm683, %v636
      %685 = vst.msk [vmem:[%s172 + $0x8] sm:$0xff] %vm683, %v638
      %686 = vst.msk [vmem:[%s172 + $0x10] sm:$0xff] %vm683, %v640
      %687 = vst.msk [vmem:[%s172 + $0x18] sm:$0xff] %vm683, %v642
      %688 = vst.msk [vmem:[%s172 + $0x20] sm:$0xff] %vm683, %v644
      %689 = vst.msk [vmem:[%s172 + $0x28] sm:$0xff] %vm683, %v646
      %690 = vst.msk [vmem:[%s172 + $0x30] sm:$0xff] %vm683, %v648
      %691 = vst.msk [vmem:[%s172 + $0x38] sm:$0xff] %vm683, %v650
      %692 = vst.msk [vmem:[%s172 + $0x40] sm:$0xff] %vm683, %v652
      %693 = vst.msk [vmem:[%s172 + $0x48] sm:$0xff] %vm683, %v654
      %694 = vst.msk [vmem:[%s172 + $0x50] sm:$0xff] %vm683, %v656
      %695 = vst.msk [vmem:[%s172 + $0x58] sm:$0xff] %vm683, %v658
      %696 = vst.msk [vmem:[%s172 + $0x60] sm:$0xff] %vm683, %v660
      %697 = vst.msk [vmem:[%s172 + $0x68] sm:$0xff] %vm683, %v662
      %698 = vst.msk [vmem:[%s172 + $0x70] sm:$0xff] %vm683, %v664
      %699 = vst.msk [vmem:[%s172 + $0x78] sm:$0xff] %vm683, %v666
      %v700 = vsub.f32 1.0, %v603
      %v701 = vsub.f32 1.0, %v604
      %v702 = vsub.f32 1.0, %v605
      %v703 = vsub.f32 1.0, %v606
      %v704 = vsub.f32 1.0, %v607
      %v705 = vsub.f32 1.0, %v608
      %v706 = vsub.f32 1.0, %v609
      %v707 = vsub.f32 1.0, %v610
      %v708 = vsub.f32 1.0, %v611
      %v709 = vsub.f32 1.0, %v612
      %v710 = vsub.f32 1.0, %v613
      %v711 = vsub.f32 1.0, %v614
      %v712 = vsub.f32 1.0, %v615
      %v713 = vsub.f32 1.0, %v616
      %v714 = vsub.f32 1.0, %v617
      %v715 = vsub.f32 1.0, %v618
      %vm716 = vcmask 7168
      %717 = vst.msk [vmem:[%s172] sm:$0xff] %vm716, %v700
      %718 = vst.msk [vmem:[%s172 + $0x8] sm:$0xff] %vm716, %v701
      %719 = vst.msk [vmem:[%s172 + $0x10] sm:$0xff] %vm716, %v702
      %720 = vst.msk [vmem:[%s172 + $0x18] sm:$0xff] %vm716, %v703
      %721 = vst.msk [vmem:[%s172 + $0x20] sm:$0xff] %vm716, %v704
      %722 = vst.msk [vmem:[%s172 + $0x28] sm:$0xff] %vm716, %v705
      %723 = vst.msk [vmem:[%s172 + $0x30] sm:$0xff] %vm716, %v706
      %724 = vst.msk [vmem:[%s172 + $0x38] sm:$0xff] %vm716, %v707
      %725 = vst.msk [vmem:[%s172 + $0x40] sm:$0xff] %vm716, %v708
      %726 = vst.msk [vmem:[%s172 + $0x48] sm:$0xff] %vm716, %v709
      %727 = vst.msk [vmem:[%s172 + $0x50] sm:$0xff] %vm716, %v710
      %728 = vst.msk [vmem:[%s172 + $0x58] sm:$0xff] %vm716, %v711
      %729 = vst.msk [vmem:[%s172 + $0x60] sm:$0xff] %vm716, %v712
      %730 = vst.msk [vmem:[%s172 + $0x68] sm:$0xff] %vm716, %v713
      %731 = vst.msk [vmem:[%s172 + $0x70] sm:$0xff] %vm716, %v714
      %732 = vst.msk [vmem:[%s172 + $0x78] sm:$0xff] %vm716, %v715
      %s733 = smul.u32 16, %s14
      %p734 = scmp.lt.s32.totalorder %s733, 31
      %s735 = scalar_select %p734, %s733, 31
      %s736 = smul.addr %s735, 8
      %s737 = scalar_lea.vmem %s3, %s736
      // Predicated region
      $region33: #{tpu_custom_call.1} parent=31 // pred_check
        %p738 = pneg %p100
      $region34: #{tpu_custom_call.1} parent=31 // pred_check_branch
        %740 = sbr.rel (%p738) target = $region36
      $region35: #{tpu_custom_call.1} parent=31 // pred_region
        %s741 = smul.u32 16, %s14
      $region36: #{tpu_custom_call.1} parent=31 // pred_fallthru
        _
    $region32: #{tpu_custom_call.1} parent=5 // pred_fallthru
      _
    %p742 = scmp.le.s32.totalorder 2, %s9
    // Predicated region
    $region37: #{tpu_custom_call.1} parent=5 // pred_check
      %p743 = pneg %p742
    $region38: #{tpu_custom_call.1} parent=5 // pred_check_branch
      %745 = sbr.rel (%p743) target = $region40
    $region39: #{tpu_custom_call.1} parent=5 // pred_region
      %s746 = ssub.s32 %s9, 2
      // Predicated region
      $region41: #{tpu_custom_call.1} parent=39 // pred_check
        %p747 = pneg %p106
      $region42: #{tpu_custom_call.1} parent=39 // pred_check_branch
        %749 = sbr.rel (%p747) target = $region44
      $region43: #{tpu_custom_call.1} parent=39 // pred_region
        %s750 = smul.u32 16, %s15
        %p751 = scmp.lt.s32.totalorder %s750, 31
        %s752 = scalar_select %p751, %s750, 31
        %s753 = smul.addr %s752, 8
        %s754 = scalar_lea.vmem %s3, %s753
      $region44: #{tpu_custom_call.1} parent=39 // pred_fallthru
        _
    $region40: #{tpu_custom_call.1} parent=5 // pred_fallthru
      _
  $region6: #{tpu_custom_call.1} parent=0 // loop_footer
    %s13 = sadd.s32 1, %s9
  $region7: #{tpu_custom_call.1} parent=0 // loop_footer_branch
    %8 = sbr.rel target = $region3
  $region8: #{tpu_custom_call.1} parent=0 // loop_exit
    _

</llo_original>
